<compile_context>
chip_gen: v6e
topology: v6e:2x2x1
jax: 0.10.0
libtpu: 0.0.40
codegen_flags: <defaults>
</compile_context>

<pallas_src>
import jax
import jax.numpy as jnp
from jax.experimental import pallas as pl
from jax.experimental.pallas import tpu as pltpu


# ----------------------------------------------------------------------------
# Small-input path: one grid step, write the four quadrants directly.
# ----------------------------------------------------------------------------
def _tile_quadrants_kernel(x_ref, o_ref):
    R, C = x_ref.shape
    x = x_ref[...]
    o_ref[:R, :C] = x
    o_ref[:R, C:] = x
    o_ref[R:, :C] = x
    o_ref[R:, C:] = x


def _tile_small(x: jax.Array) -> jax.Array:
    R, C = x.shape
    return pl.pallas_call(
        _tile_quadrants_kernel,
        out_shape=jax.ShapeDtypeStruct((2 * R, 2 * C), x.dtype),
        grid=(1,),  # single step: no per-step grid overhead
        in_specs=[pl.BlockSpec((R, C), lambda i: (0, 0))],
        out_specs=pl.BlockSpec((2 * R, 2 * C), lambda i: (0, 0)),
    )(x)


# ----------------------------------------------------------------------------
# Tiled path: auto-pipelined input blocks + manual DMA writeback of quadrants.
# ----------------------------------------------------------------------------
def _largest_aligned_divisor(n: int, align: int, cap: int) -> int:
    """Largest d <= cap with d % align == 0 and n % d == 0 (requires n % align == 0)."""
    best = align
    d = align
    limit = min(n, max(cap, align))
    while d <= limit:
        if n % d == 0:
            best = d
        d += align
    return best


def _tiled_block_cap_bytes() -> int:
    # Only the input block is BlockSpec-managed (double-buffered) in the tiled
    # path, so 2 x cap must stay under the default scoped-VMEM limit:
    # 16 MiB on v5e (and conservatively anything older/unknown), 32 MiB on
    # v6e/v7x.  No vmem_limit_bytes override needed.
    try:
        kind = jax.devices()[0].device_kind.lower()
    except Exception:
        kind = ""
    if ("v6" in kind) or ("7" in kind):
        return 8 * 1024 * 1024  # 2 x 8 MiB = 16 MiB < 32 MiB scoped default
    return 4 * 1024 * 1024      # 2 x 4 MiB =  8 MiB < 16 MiB scoped default


def _tile_tiled(x: jax.Array) -> jax.Array:
    R, C = x.shape
    itemsize = x.dtype.itemsize
    cap = _tiled_block_cap_bytes()

    # Row tile: multiple of 8 dividing R; full R when R is not 8-aligned
    # (a full-dim block satisfies the (8,128) rule without padding).
    if R % 8 == 0:
        max_tr = max(8, cap // max(1, C * itemsize))
        tr = _largest_aligned_divisor(R, 8, max_tr)
    else:
        tr = R

    # Column tile: full width (maximally contiguous writeback rows) unless a
    # single tr-row slab would blow the VMEM budget and C is lane-aligned.
    tc = C
    if tr * C * itemsize > cap and C % 128 == 0:
        tc = _largest_aligned_divisor(C, 128, max(128, cap // max(1, tr * itemsize)))
    # TODO(synk): inputs larger than the VMEM budget that are splittable on
    # neither axis (R % 8 != 0 and C % 128 != 0) would need ragged-tail DMAs.

    n_i, n_j = R // tr, C // tc

    # v7x megacore: guarantee >= 2 spatial tiles so both TensorCores (each
    # with its own HBM port) get work.  v5e/v6e (1 TC) are unaffected.
    if n_i * n_j < 2 and R % 8 == 0 and tr >= 16:
        tr2 = _largest_aligned_divisor(R, 8, max(8, tr // 2))
        if tr2 < tr:
            tr = tr2
            n_i = R // tr

    def kernel(x_ref, o_hbm, sem):
        i = pl.program_id(0)
        j = pl.program_id(1)
        r_top = i * tr
        r_bot = r_top + R
        c_left = j * tc
        c_right = c_left + C
        # Four quadrant writes of this input tile, all in flight at once.
        copies = []
        q = 0
        for r in (r_top, r_bot):
            for c in (c_left, c_right):
                cp = pltpu.make_async_copy(
                    x_ref,
                    o_hbm.at[pl.ds(r, tr), pl.ds(c, tc)],
                    sem.at[q],
                )
                cp.start()
                copies.append(cp)
                q += 1
        for cp in copies:
            cp.wait()

    return pl.pallas_call(
        kernel,
        out_shape=jax.ShapeDtypeStruct((2 * R, 2 * C), x.dtype),
        grid=(n_i, n_j),
        in_specs=[pl.BlockSpec((tr, tc), lambda i, j: (i, j))],
        out_specs=pl.BlockSpec(memory_space=pl.ANY),  # raw HBM ref, manual DMA
        scratch_shapes=[pltpu.SemaphoreType.DMA((4,))],
        compiler_params=pltpu.CompilerParams(
            dimension_semantics=("parallel", "parallel"),
        ),
        cost_estimate=pl.CostEstimate(
            flops=0,
            transcendentals=0,
            bytes_accessed=5 * R * C * itemsize,
        ),
    )(x)


# ----------------------------------------------------------------------------
# Dispatcher (same semantics as torch.tile(x, (2, 2)) for rank-2 inputs).
# ----------------------------------------------------------------------------
_SMALL_RESIDENT_BYTES = 4 * 1024 * 1024  # 5x input bytes resident in one VMEM step


def tile_2x2(x: jax.Array) -> jax.Array:
    """Equivalent of torch.tile(x, (2, 2)) for a 2-D array."""
    if x.ndim != 2:
        raise ValueError(f"tile_2x2 expects a rank-2 input, got shape {x.shape}")
    R, C = x.shape
    resident = 5 * R * C * x.dtype.itemsize
    if resident <= _SMALL_RESIDENT_BYTES:
        return _tile_small(x)
    return _tile_tiled(x)


if __name__ == "__main__":
    key = jax.random.PRNGKey(0)
    k1, k2, k3 = jax.random.split(key, 3)

    # Small aligned rank-2 f32 input consistent with the unit module
    # (exercises the single-step small path).
    x = jax.random.normal(k1, (8, 128), dtype=jnp.float32)
    out = jax.block_until_ready(tile_2x2(x))
    ref = jnp.tile(x, (2, 2))
    assert out.shape == (16, 256), out.shape
    assert out.dtype == jnp.float32
    assert jnp.array_equal(out, ref), "small path mismatch vs jnp.tile"

    # Small unaligned shape (masked / offset stores in the quadrant kernel).
    x_odd = jax.random.normal(k2, (5, 37), dtype=jnp.float32)
    out_odd = jax.block_until_ready(tile_2x2(x_odd))
    assert out_odd.shape == (10, 74), out_odd.shape
    assert jnp.array_equal(out_odd, jnp.tile(x_odd, (2, 2))), "odd-shape mismatch"

    # Moderate aligned shape -> tiled manual-writeback path (>= 2 grid steps).
    x_big = jax.random.normal(k3, (512, 1024), dtype=jnp.float32)
    out_big = jax.block_until_ready(tile_2x2(x_big))
    assert out_big.shape == (1024, 2048), out_big.shape
    assert out_big.dtype == jnp.float32
    assert jnp.array_equal(out_big, jnp.tile(x_big, (2, 2))), "tiled path mismatch"

    print("KERNEL_OK")
</pallas_src>

<mosaic_0001>
module attributes {stable_mosaic.version = 11 : i64} {
  func.func @_tile_quadrants_kernel(%arg0: i32, %arg1: memref<8x128xf32, #tpu.memory_space<vmem>>, %arg2: memref<16x256xf32, #tpu.memory_space<vmem>>) attributes {dimension_semantics = [#tpu.dimension_semantics<arbitrary>], iteration_bounds = array<i64: 1>, scalar_prefetch = 0 : i64, scratch_operands = 0 : i64, tpu.core_type = #tpu.core_type<tc>, window_params = [{pipeline_mode = #tpu.pipeline_mode<synchronous>, transform_indices = @transform_0, window_bounds = array<i64: 8, 128>}, {pipeline_mode = #tpu.pipeline_mode<synchronous>, transform_indices = @transform_1, window_bounds = array<i64: 16, 256>}]} {
    %c0 = arith.constant 0 : index
    %c0_0 = arith.constant 0 : index
    %0 = vector.load %arg1[%c0, %c0_0] : memref<8x128xf32, #tpu.memory_space<vmem>>, vector<8x128xf32>
    %c0_1 = arith.constant 0 : index
    %c0_2 = arith.constant 0 : index
    %1 = vector.load %arg2[%c0_1, %c0_2] : memref<16x256xf32, #tpu.memory_space<vmem>>, vector<8x128xf32>
    tpu.vector_store %arg2[%c0_1, %c0_2], %0 {strides = array<i32>} : memref<16x256xf32, #tpu.memory_space<vmem>>, vector<8x128xf32>,
    %c0_3 = arith.constant 0 : index
    %c128 = arith.constant 128 : index
    %2 = vector.load %arg2[%c0_3, %c128] : memref<16x256xf32, #tpu.memory_space<vmem>>, vector<8x128xf32>
    tpu.vector_store %arg2[%c0_3, %c128], %0 {strides = array<i32>} : memref<16x256xf32, #tpu.memory_space<vmem>>, vector<8x128xf32>,
    %c8 = arith.constant 8 : index
    %c0_4 = arith.constant 0 : index
    %3 = vector.load %arg2[%c8, %c0_4] : memref<16x256xf32, #tpu.memory_space<vmem>>, vector<8x128xf32>
    tpu.vector_store %arg2[%c8, %c0_4], %0 {strides = array<i32>} : memref<16x256xf32, #tpu.memory_space<vmem>>, vector<8x128xf32>,
    %c8_5 = arith.constant 8 : index
    %c128_6 = arith.constant 128 : index
    %4 = vector.load %arg2[%c8_5, %c128_6] : memref<16x256xf32, #tpu.memory_space<vmem>>, vector<8x128xf32>
    tpu.vector_store %arg2[%c8_5, %c128_6], %0 {strides = array<i32>} : memref<16x256xf32, #tpu.memory_space<vmem>>, vector<8x128xf32>,
    return
  }
  func.func @transform_0(%arg0: i32) -> (i32, i32) {
    %c0_i32 = arith.constant 0 : i32
    %c0_i32_0 = arith.constant 0 : i32
    %c0_i32_1 = arith.constant 0 : i32
    return %c0_i32, %c0_i32_0 : i32, i32
  }
  func.func @transform_1(%arg0: i32) -> (i32, i32) {
    %c0_i32 = arith.constant 0 : i32
    %c0_i32_0 = arith.constant 0 : i32
    %c0_i32_1 = arith.constant 0 : i32
    return %c0_i32, %c0_i32_0 : i32, i32
  }
}

</mosaic_0001>

<llo_original>
// kernel: tpu_custom_call.1
$region0: #{tpu_custom_call.1}
  #allocation0 [shape = 'u32[]', space=smem, size = 0x4, offset = 0x4, fixed_abs, tag = 'smem constant byte address 0x4 - core index']
  #allocation1 [shape = 'u32[144,128]{1,0:T(1,128)}', space=vmem, size = 0x12000, scoped, tag = 'internal scratch']
  %s0 = inlined_call_operand.hbm [shape: f32[8,128], index: 0, kind: input, shape index: {}]
  %s1 = inlined_call_operand.hbm [shape: f32[16,256], index: 1, kind: output, shape index: {}]
  %s2 = sld [smem:[#allocation0]]
  $region18: #{tpu_custom_call.1} parent=0
    _
  %s4 = ssub.s32 1, %s2
  %s5 = scalar_select 0, %s4, %s2
  $region1: #{tpu_custom_call.1} parent=0
    #allocation2 [shape = 'u8[4096]{0}', space=vmem, size = 0x1000, scoped, tag = 'input window, operand 0, single buffered']
    #allocation3 [shape = 's32[1]{0}', space=sflag, size = 0x4, scoped, tag = 'scoped memory for tpu_custom_call.1']
    #allocation4 [shape = 's32[1]{0}', space=sflag, size = 0x4, scoped, tag = 'scoped memory for tpu_custom_call.1']
    #allocation5 [shape = 'u8[16384]{0}', space=vmem, size = 0x4000, scoped, tag = 'output window, operand 0, single buffered']
    %6 = vsyncpa [#allocation3], 0
    %7 = vsyncpa [#allocation4], 0
    // Predicated region
    $region2: #{tpu_custom_call.1} parent=1 // pred_check
      _
    $region3: #{tpu_custom_call.1} parent=1 // pred_check_branch
      %9 = sbr.rel (0) target = $region5
    $region4: #{tpu_custom_call.1} parent=1 // pred_region
      %s11 = ssub.s32 128, 128
      %12 = vsyncadd [#allocation3], %s11
      %s14 = sshll.u32 [#allocation2], 4
      %s15 = int_to_ptr.vmem [resolvable:$true] %s14
      %17 = dma.hbm_to_vmem [thread:$0]  %s0, 128, %s15, [#allocation3]
    $region5: #{tpu_custom_call.1} parent=1 // pred_fallthru
      _
    // Predicated region
    $region6: #{tpu_custom_call.1} parent=1 // pred_check
      _
    $region7: #{tpu_custom_call.1} parent=1 // pred_check_branch
      %19 = sbr.rel (0) target = $region9
    $region8: #{tpu_custom_call.1} parent=1 // pred_region
      %20 = dma.done [#allocation3], 128
    $region9: #{tpu_custom_call.1} parent=1 // pred_fallthru
      _
    %v21 = vld [vmem:[#allocation2] sm:$0xff]
    %22 = vst [vmem:[#allocation5] sm:$0xff] %v21
    %23 = vst [vmem:[#allocation5 + $0x8] sm:$0xff] %v21
    %24 = vst [vmem:[#allocation5 + $0x10] sm:$0xff] %v21
    %25 = vst [vmem:[#allocation5 + $0x18] sm:$0xff] %v21
    // Predicated region
    $region10: #{tpu_custom_call.1} parent=1 // pred_check
      _
    $region11: #{tpu_custom_call.1} parent=1 // pred_check_branch
      %27 = sbr.rel (0) target = $region13
    $region12: #{tpu_custom_call.1} parent=1 // pred_region
      %s29 = ssub.s32 512, 512
      %30 = vsyncadd [#allocation4], %s29
      %s31 = sshll.u32 [#allocation5], 4
      %s32 = int_to_ptr.vmem [resolvable:$true] %s31
      %37 = dma.vmem_to_hbm [thread:$0]  %s32, 512, %s1, [#allocation4], 256, 256, 16
    $region13: #{tpu_custom_call.1} parent=1 // pred_fallthru
      _
    // Predicated region
    $region14: #{tpu_custom_call.1} parent=1 // pred_check
      _
    $region15: #{tpu_custom_call.1} parent=1 // pred_check_branch
      %39 = sbr.rel (0) target = $region17
    $region16: #{tpu_custom_call.1} parent=1 // pred_region
      %40 = dma.done [#allocation4], 512
    $region17: #{tpu_custom_call.1} parent=1 // pred_fallthru
      _
    %41 = vsyncpa [#allocation3], 1
    %42 = vsyncpa [#allocation4], 1

</llo_original>
